<compile_context>
chip_gen: v7x
topology: tpu7x:2x2x1
jax: 0.10.0
libtpu: 0.0.40
codegen_flags: <defaults>
</compile_context>

<pallas_src>
import functools

import jax
import jax.numpy as jnp
from jax.experimental import pallas as pl
from jax.experimental.pallas import tpu as pltpu


# ----------------------------------------------------------------- helpers

def _pick_tile(dim, target, align):
    """Largest tile <= target that divides dim and is a multiple of `align`;
    falls back to the full dimension (always a legal block size)."""
    if dim <= target:
        return dim
    t = (min(dim, target) // align) * align
    while t >= align:
        if dim % t == 0:
            return t
        t -= align
    return dim


def _heads_per_group(hidden, num_heads):
    """Smallest head-group size whose lane width is a multiple of 128
    (e.g. 2 heads of 64 for BERT-base); falls back to all heads."""
    dh = hidden // num_heads
    for hg in range(1, num_heads + 1):
        if num_heads % hg == 0 and (hg * dh) % 128 == 0:
            return hg
    return num_heads


# ------------------------------------------------------------------ kernels

def _matmul_kernel(x_ref, w_ref, b_ref, *rest, activation, fuse_ln, eps):
    """Tiled  y = x @ w + b  with optional fused GELU and fused
    residual-add + LayerNorm epilogue (applied on the last K step only)."""
    if fuse_ln:
        r_ref, g_ref, bb_ref, o_ref, acc_ref = rest
    else:
        o_ref, acc_ref = rest

    @pl.when(pl.program_id(2) == 0)
    def _():
        acc_ref[...] = jnp.zeros_like(acc_ref)

    x = x_ref[...]
    if x.dtype != jnp.bfloat16:
        x = x.astype(jnp.bfloat16)
    w = w_ref[...]
    if w.dtype != jnp.bfloat16:
        w = w.astype(jnp.bfloat16)
    acc_ref[...] += jnp.dot(x, w, preferred_element_type=jnp.float32)

    @pl.when(pl.program_id(2) == pl.num_programs(2) - 1)
    def _():
        y = acc_ref[...] + b_ref[...]
        if activation == "gelu":
            # TODO(synk): HF BERT uses exact erf-GELU; tanh approximation kept
            # (no guaranteed Mosaic erf lowering) -> tiny numeric drift.
            c = jnp.float32(0.7978845608028654)  # sqrt(2/pi)
            y = 0.5 * y * (1.0 + jnp.tanh(c * (y + 0.044715 * y * y * y)))
        if fuse_ln:
            h = y + r_ref[...].astype(jnp.float32)
            mu = jnp.mean(h, axis=-1, keepdims=True)
            d = h - mu
            var = jnp.mean(d * d, axis=-1, keepdims=True)
            y = d * jax.lax.rsqrt(var + eps) * g_ref[...] + bb_ref[...]
        o_ref[...] = y.astype(o_ref.dtype)


def linear(x, w, b, *, activation=None, residual=None, gamma=None, beta=None,
           eps=1e-12, out_dtype=jnp.bfloat16,
           tm_target=512, tn_target=512, tk_target=512):
    """Gridded matmul. When residual/gamma/beta are given, residual-add +
    LayerNorm is fused into the epilogue (N kept as a single tile so the full
    row is available for the row statistics)."""
    M, K = x.shape
    N = w.shape[1]
    fuse_ln = residual is not None

    tm = _pick_tile(M, tm_target, 8)
    tk = _pick_tile(K, tk_target, 128)
    tn = N if fuse_ln else _pick_tile(N, tn_target, 128)
    grid = (M // tm, N // tn, K // tk)

    in_specs = [pl.BlockSpec((tm, tk), lambda i, j, k: (i, k)),
                pl.BlockSpec((tk, tn), lambda i, j, k: (k, j)),
                pl.BlockSpec((1, tn), lambda i, j, k: (0, j))]
    args = [x, w, b.reshape(1, N)]
    if fuse_ln:
        in_specs += [pl.BlockSpec((tm, tn), lambda i, j, k: (i, j)),
                     pl.BlockSpec((1, tn), lambda i, j, k: (0, j)),
                     pl.BlockSpec((1, tn), lambda i, j, k: (0, j))]
        args += [residual, gamma.reshape(1, N), beta.reshape(1, N)]

    return pl.pallas_call(
        functools.partial(_matmul_kernel, activation=activation,
                          fuse_ln=fuse_ln, eps=eps),
        grid=grid,
        in_specs=in_specs,
        out_specs=pl.BlockSpec((tm, tn), lambda i, j, k: (i, j)),
        out_shape=jax.ShapeDtypeStruct((M, N), out_dtype),
        scratch_shapes=[pltpu.VMEM((tm, tn), jnp.float32)],
        compiler_params=pltpu.CompilerParams(
            dimension_semantics=("parallel", "parallel", "arbitrary"),
            vmem_limit_bytes=48 * 1024 * 1024),
    )(*args)


def _ln_kernel(x_ref, g_ref, b_ref, o_ref, *, eps):
    h = x_ref[...].astype(jnp.float32)
    mu = jnp.mean(h, axis=-1, keepdims=True)
    d = h - mu
    var = jnp.mean(d * d, axis=-1, keepdims=True)
    y = d * jax.lax.rsqrt(var + eps) * g_ref[...] + b_ref[...]
    o_ref[...] = y.astype(o_ref.dtype)


def layernorm(x, gamma, beta, eps=1e-12, out_dtype=jnp.bfloat16):
    """Standalone LayerNorm (used once, on the embeddings)."""
    M, H = x.shape
    tm = _pick_tile(M, 512, 8)
    return pl.pallas_call(
        functools.partial(_ln_kernel, eps=eps),
        grid=(M // tm,),
        in_specs=[pl.BlockSpec((tm, H), lambda i: (i, 0)),
                  pl.BlockSpec((1, H), lambda i: (0, 0)),
                  pl.BlockSpec((1, H), lambda i: (0, 0))],
        out_specs=pl.BlockSpec((tm, H), lambda i: (i, 0)),
        out_shape=jax.ShapeDtypeStruct((M, H), out_dtype),
        compiler_params=pltpu.CompilerParams(
            dimension_semantics=("parallel",)),
    )(x, gamma.reshape(1, H), beta.reshape(1, H))


def _attn_kernel(qkv_ref, mask_ref, o_ref, *, heads_in_block, head_dim):
    # qkv_ref: (1, S, 3W) bf16 -- one batch element, one head group laid out
    # as [Qg | Kg | Vg]; mask_ref: (1, 1, S) f32; o_ref: (1, S, W) bf16.
    W = heads_in_block * head_dim
    # HF-style additive mask; -1e9 instead of finfo.min avoids -inf/NaN corner
    # cases on fully-masked rows while giving a numerically identical softmax.
    bias = (1.0 - mask_ref[0]) * jnp.float32(-1e9)          # (1, S)

    # TODO(synk): for very long S, tile q/k with an online (flash) softmax;
    # the per-group (S, S) score tile here is fine for BERT-scale S (<= ~1k).
    ctx = []
    for h in range(heads_in_block):
        q = qkv_ref[0, :, h * head_dim:(h + 1) * head_dim]
        k = qkv_ref[0, :, W + h * head_dim:W + (h + 1) * head_dim]
        v = qkv_ref[0, :, 2 * W + h * head_dim:2 * W + (h + 1) * head_dim]
        # 1/sqrt(Dh) is pre-folded into the Q weights/bias -> no scale here.
        s = jax.lax.dot_general(q, k, (((1,), (1,)), ((), ())),
                                preferred_element_type=jnp.float32)   # (S, S)
        s = s + bias
        m = jnp.max(s, axis=-1, keepdims=True)
        p = jnp.exp(s - m)
        p = p * pl.reciprocal(jnp.sum(p, axis=-1, keepdims=True), approx=True)
        ctx.append(jnp.dot(p.astype(jnp.bfloat16), v,
                           preferred_element_type=jnp.float32))       # (S, Dh)
    out = ctx[0] if len(ctx) == 1 else jnp.concatenate(ctx, axis=-1)  # (S, W)
    o_ref[0, :, :] = out.astype(o_ref.dtype)   # single lane-dense block store


def attention(qkv, mask3, num_heads):
    """qkv: (B, S, 3H) bf16 with columns pre-permuted into per-head-group
    [Qg | Kg | Vg] blocks; mask3: (B, 1, S) f32.
    Returns (B, S, H) bf16 with heads concatenated in original order."""
    B, S, H3 = qkv.shape
    H = H3 // 3
    dh = H // num_heads
    hg = _heads_per_group(H, num_heads)
    G = num_heads // hg
    W = hg * dh
    return pl.pallas_call(
        functools.partial(_attn_kernel, heads_in_block=hg, head_dim=dh),
        grid=(B, G),
        in_specs=[pl.BlockSpec((1, S, 3 * W), lambda b, g: (b, 0, g)),
                  pl.BlockSpec((1, 1, S), lambda b, g: (b, 0, 0))],
        out_specs=pl.BlockSpec((1, S, W), lambda b, g: (b, 0, g)),
        out_shape=jax.ShapeDtypeStruct((B, S, H), jnp.bfloat16),
        compiler_params=pltpu.CompilerParams(
            dimension_semantics=("parallel", "parallel")),
    )(qkv, mask3)


def _feat_kernel(h_ref, m_ref, o_ref, *, k):
    # Matches the torch reference exactly: stack(...).mean(0), then another
    # divide by num_layers_of_embedded, then mask multiply.
    feat = jnp.mean(h_ref[...].astype(jnp.float32), axis=0) / k
    o_ref[...] = feat * m_ref[...]


def features_embed(hidden_stack, mask2d, k):
    kE, M, H = hidden_stack.shape
    tm = _pick_tile(M, 512, 8)
    return pl.pallas_call(
        functools.partial(_feat_kernel, k=k),
        grid=(M // tm,),
        in_specs=[pl.BlockSpec((kE, tm, H), lambda i: (0, i, 0)),
                  pl.BlockSpec((tm, 1), lambda i: (i, 0))],
        out_specs=pl.BlockSpec((tm, H), lambda i: (i, 0)),
        out_shape=jax.ShapeDtypeStruct((M, H), jnp.float32),
        compiler_params=pltpu.CompilerParams(
            dimension_semantics=("parallel",)),
    )(hidden_stack, mask2d)


# ------------------------------------------------------------ params / glue

def _build_qkv(qw, kw, vw, qb, kb, vb, num_heads, hg, scale):
    """Fuse Q/K/V into one (H, 3H) weight, permuted into per-head-group
    [Qg | Kg | Vg] blocks, with the softmax scale folded into Q."""
    H = qw.shape[1]
    dh = H // num_heads
    G = num_heads // hg
    w_parts, b_parts = [], []
    for g in range(G):
        sl = slice(g * hg * dh, (g + 1) * hg * dh)
        w_parts += [qw[:, sl] * scale, kw[:, sl], vw[:, sl]]
        b_parts += [qb[sl] * scale, kb[sl], vb[sl]]
    return (jnp.concatenate(w_parts, axis=1).astype(jnp.bfloat16),
            jnp.concatenate(b_parts, axis=0).astype(jnp.float32))


def init_params(key, vocab, max_pos, type_vocab, H, I, L, num_heads):
    keys = iter(jax.random.split(key, 8 * L + 8))
    std = jnp.float32(0.02)

    def w(shape):
        return jax.random.normal(next(keys), shape, jnp.float32) * std

    dh = H // num_heads
    hg = _heads_per_group(H, num_heads)
    scale = 1.0 / (dh ** 0.5)

    params = {
        "word_emb": w((vocab, H)),
        "pos_emb": w((max_pos, H)),
        "type_emb": w((type_vocab, H)),
        "emb_ln_g": jnp.ones((H,), jnp.float32),
        "emb_ln_b": jnp.zeros((H,), jnp.float32),
        "layers": [],
    }
    for _ in range(L):
        qw, kw, vw = w((H, H)), w((H, H)), w((H, H))
        zb = jnp.zeros((H,), jnp.float32)
        qkv_w, qkv_b = _build_qkv(qw, kw, vw, zb, zb, zb, num_heads, hg, scale)
        params["layers"].append({
            # fused + group-permuted QKV projection; matmul weights bf16,
            # biases / LN params f32
            "qkv_w": qkv_w,
            "qkv_b": qkv_b,
            "ao_w": w((H, H)).astype(jnp.bfloat16),
            "ao_b": jnp.zeros((H,), jnp.float32),
            "ao_ln_g": jnp.ones((H,), jnp.float32),
            "ao_ln_b": jnp.zeros((H,), jnp.float32),
            "i_w": w((H, I)).astype(jnp.bfloat16),
            "i_b": jnp.zeros((I,), jnp.float32),
            "o_w": w((I, H)).astype(jnp.bfloat16),
            "o_b": jnp.zeros((H,), jnp.float32),
            "o_ln_g": jnp.ones((H,), jnp.float32),
            "o_ln_b": jnp.zeros((H,), jnp.float32),
        })
    return params


def bert_encoder_forward(params, x_dict, *, num_heads, num_layers_of_embedded=1):
    input_ids = x_dict["input_ids"]
    attention_mask = x_dict["attention_mask"]
    position_ids = x_dict["position_ids"]
    token_type_ids = x_dict["token_type_ids"]

    B, S = input_ids.shape
    H = params["word_emb"].shape[1]
    M = B * S

    # --- embeddings (gathers stay in XLA; LayerNorm in Pallas, bf16 out) ---
    emb = (jnp.take(params["word_emb"], input_ids, axis=0)
           + jnp.take(params["pos_emb"], position_ids, axis=0)
           + jnp.take(params["type_emb"], token_type_ids, axis=0))
    x = layernorm(emb.reshape(M, H).astype(jnp.float32),
                  params["emb_ln_g"], params["emb_ln_b"])          # bf16

    maskf = attention_mask.astype(jnp.float32)                     # [B, S]
    mask3 = maskf.reshape(B, 1, S)

    hidden_states = []
    for lp in params["layers"]:
        # fused QKV projection: [M, H] @ [H, 3H] -> [M, 3H] bf16
        qkv = linear(x, lp["qkv_w"], lp["qkv_b"], out_dtype=jnp.bfloat16)
        # per-(batch, head-group) attention; lane-dense [B, S, H] bf16 output
        ctx = attention(qkv.reshape(B, S, 3 * H), mask3, num_heads)
        # attention-output projection + fused residual-add + LayerNorm (bf16)
        x = linear(ctx.reshape(M, H), lp["ao_w"], lp["ao_b"],
                   residual=x, gamma=lp["ao_ln_g"], beta=lp["ao_ln_b"],
                   out_dtype=jnp.bfloat16)
        # FFN: H -> I with fused GELU, then I -> H with fused add + LayerNorm
        inter = linear(x, lp["i_w"], lp["i_b"], activation="gelu",
                       out_dtype=jnp.bfloat16)
        x = linear(inter, lp["o_w"], lp["o_b"],
                   residual=x, gamma=lp["o_ln_g"], beta=lp["o_ln_b"],
                   out_dtype=jnp.bfloat16)
        hidden_states.append(x)

    # --- BertEncoder.forward tail ---
    kE = num_layers_of_embedded
    stack = jnp.stack(hidden_states[-kE:], axis=0)                 # [kE, M, H]
    embedded = features_embed(stack, maskf.reshape(M, 1), kE).reshape(B, S, H)
    hidden = hidden_states[-1].astype(jnp.float32).reshape(B, S, H)
    return {"embedded": embedded, "masks": attention_mask, "hidden": hidden}


# --------------------------------------------------------------------- main

if __name__ == "__main__":
    B, S = 2, 8
    H, I, nH, L = 32, 64, 4, 2
    vocab, max_pos, type_vocab = 100, 64, 2

    key = jax.random.PRNGKey(0)
    k_param, k_ids = jax.random.split(key)

    params = init_params(k_param, vocab, max_pos, type_vocab, H, I, L, nH)

    input_ids = jax.random.randint(k_ids, (B, S), 0, vocab, dtype=jnp.int32)
    attention_mask = jnp.array(
        [[1, 1, 1, 1, 1, 1, 1, 1],
         [1, 1, 1, 1, 1, 0, 0, 0]], dtype=jnp.int32)
    position_ids = jnp.broadcast_to(jnp.arange(S, dtype=jnp.int32), (B, S))
    token_type_ids = jnp.zeros((B, S), dtype=jnp.int32)

    x = {
        "input_ids": input_ids,
        "attention_mask": attention_mask,
        "position_ids": position_ids,
        "token_type_ids": token_type_ids,
    }

    out = bert_encoder_forward(params, x, num_heads=nH,
                               num_layers_of_embedded=1)
    jax.block_until_ready(out)

    assert out["embedded"].shape == (B, S, H)
    assert out["hidden"].shape == (B, S, H)
    assert out["masks"].shape == (B, S)
    assert bool(jnp.all(jnp.isfinite(out["embedded"])))
    assert bool(jnp.all(jnp.isfinite(out["hidden"])))
    print("KERNEL_OK")
</pallas_src>

<mosaic_0001>
module attributes {stable_mosaic.version = 11 : i64} {
  func.func @_ln_kernel(%arg0: i32, %arg1: memref<16x32xf32, #tpu.memory_space<vmem>>, %arg2: memref<1x32xf32, #tpu.memory_space<vmem>>, %arg3: memref<1x32xf32, #tpu.memory_space<vmem>>, %arg4: memref<16x32xbf16, #tpu.memory_space<vmem>>) attributes {dimension_semantics = [#tpu.dimension_semantics<parallel>], iteration_bounds = array<i64: 1>, scalar_prefetch = 0 : i64, scratch_operands = 0 : i64, tpu.core_type = #tpu.core_type<tc>, window_params = [{transform_indices = @transform_0, window_bounds = array<i64: 16, 32>}, {pipeline_mode = #tpu.pipeline_mode<synchronous>, transform_indices = @transform_1, window_bounds = array<i64: 1, 32>}, {pipeline_mode = #tpu.pipeline_mode<synchronous>, transform_indices = @transform_2, window_bounds = array<i64: 1, 32>}, {transform_indices = @transform_3, window_bounds = array<i64: 16, 32>}]} {
    %c0 = arith.constant 0 : index
    %c0_0 = arith.constant 0 : index
    %0 = vector.load %arg1[%c0, %c0_0] : memref<16x32xf32, #tpu.memory_space<vmem>>, vector<16x32xf32>
    %cst = arith.constant dense<0.000000e+00> : vector<16xf32>
    %1 = vector.multi_reduction <add>, %0, %cst [1] : vector<16x32xf32> to vector<16xf32>
    %2 = vector.shape_cast %1 : vector<16xf32> to vector<16x1xf32>
    %cst_1 = arith.constant 3.200000e+01 : f32
    %3 = vector.broadcast %cst_1 : f32 to vector<16x1xf32>
    %4 = arith.divf %2, %3 : vector<16x1xf32>
    %5 = vector.broadcast %4 : vector<16x1xf32> to vector<16x32xf32>
    %6 = arith.subf %0, %5 : vector<16x32xf32>
    %7 = arith.mulf %6, %6 : vector<16x32xf32>
    %cst_2 = arith.constant dense<0.000000e+00> : vector<16xf32>
    %8 = vector.multi_reduction <add>, %7, %cst_2 [1] : vector<16x32xf32> to vector<16xf32>
    %9 = vector.shape_cast %8 : vector<16xf32> to vector<16x1xf32>
    %cst_3 = arith.constant 3.200000e+01 : f32
    %10 = vector.broadcast %cst_3 : f32 to vector<16x1xf32>
    %11 = arith.divf %9, %10 : vector<16x1xf32>
    %cst_4 = arith.constant 9.99999996E-13 : f32
    %12 = vector.broadcast %cst_4 : f32 to vector<16x1xf32>
    %13 = arith.addf %11, %12 : vector<16x1xf32>
    %14 = math.rsqrt %13 : vector<16x1xf32>
    %15 = vector.broadcast %14 : vector<16x1xf32> to vector<16x32xf32>
    %16 = arith.mulf %6, %15 : vector<16x32xf32>
    %c0_5 = arith.constant 0 : index
    %c0_6 = arith.constant 0 : index
    %17 = vector.load %arg2[%c0_5, %c0_6] : memref<1x32xf32, #tpu.memory_space<vmem>>, vector<1x32xf32>
    %18 = vector.broadcast %17 : vector<1x32xf32> to vector<16x32xf32>
    %19 = arith.mulf %16, %18 : vector<16x32xf32>
    %c0_7 = arith.constant 0 : index
    %c0_8 = arith.constant 0 : index
    %20 = vector.load %arg3[%c0_7, %c0_8] : memref<1x32xf32, #tpu.memory_space<vmem>>, vector<1x32xf32>
    %21 = vector.broadcast %20 : vector<1x32xf32> to vector<16x32xf32>
    %22 = arith.addf %19, %21 : vector<16x32xf32>
    %23 = arith.truncf %22 : vector<16x32xf32> to vector<16x32xbf16>
    %c0_9 = arith.constant 0 : index
    %c0_10 = arith.constant 0 : index
    %24 = vector.load %arg4[%c0_9, %c0_10] : memref<16x32xbf16, #tpu.memory_space<vmem>>, vector<16x32xbf16>
    tpu.vector_store %arg4[%c0_9, %c0_10], %23 {strides = array<i32>} : memref<16x32xbf16, #tpu.memory_space<vmem>>, vector<16x32xbf16>,
    return
  }
  func.func @transform_0(%arg0: i32) -> (i32, i32) {
    %c0_i32 = arith.constant 0 : i32
    %c0_i32_0 = arith.constant 0 : i32
    return %arg0, %c0_i32 : i32, i32
  }
  func.func @transform_1(%arg0: i32) -> (i32, i32) {
    %c0_i32 = arith.constant 0 : i32
    %c0_i32_0 = arith.constant 0 : i32
    %c0_i32_1 = arith.constant 0 : i32
    return %c0_i32, %c0_i32_0 : i32, i32
  }
  func.func @transform_2(%arg0: i32) -> (i32, i32) {
    %c0_i32 = arith.constant 0 : i32
    %c0_i32_0 = arith.constant 0 : i32
    %c0_i32_1 = arith.constant 0 : i32
    return %c0_i32, %c0_i32_0 : i32, i32
  }
  func.func @transform_3(%arg0: i32) -> (i32, i32) {
    %c0_i32 = arith.constant 0 : i32
    %c0_i32_0 = arith.constant 0 : i32
    return %arg0, %c0_i32 : i32, i32
  }
}

</mosaic_0001>

<llo_original>
// kernel: tpu_custom_call.1
$region0: #{tpu_custom_call.1}
  #allocation0 [shape = 'u32[]', space=smem, size = 0x4, offset = 0x4, fixed_abs, tag = 'smem constant byte address 0x4 - core index']
  #allocation1 [shape = 'u32[144,128]{1,0:T(1,128)}', space=vmem, size = 0x12000, scoped, tag = 'internal scratch']
  %s0 = inlined_call_operand.hbm [shape: f32[16,32], index: 0, kind: input, shape index: {}]
  %s1 = inlined_call_operand.vmem [shape: f32[1,32], index: 1, kind: input, shape index: {}]
  %s2 = inlined_call_operand.vmem [shape: f32[1,32], index: 2, kind: input, shape index: {}]
  %s3 = inlined_call_operand.hbm [shape: bf16[16,32], index: 3, kind: output, shape index: {}]
  %s4 = sld [smem:[#allocation0]]
  $region26: #{tpu_custom_call.1} parent=0
    _
  %s6 = ssub.s32 1, %s4
  %s7 = scalar_select 0, %s6, %s4
  $region1: #{tpu_custom_call.1} parent=0
    #allocation2 [shape = 'u8[8192]{0}', space=vmem, size = 0x2000, scoped, tag = 'input window, operand 0, single buffered']
    #allocation3 [shape = 's32[1]{0}', space=sflag, size = 0x4, scoped, tag = 'scoped memory for tpu_custom_call.1']
    #allocation4 [shape = 's32[1]{0}', space=sflag, size = 0x4, scoped, tag = 'scoped memory for tpu_custom_call.1']
    #allocation5 [shape = 'u8[4096]{0}', space=vmem, size = 0x1000, scoped, tag = 'output window, operand 0, single buffered']
    %8 = vsyncpa [#allocation3], 0
    %9 = vsyncpa [#allocation4], 0
    // Predicated region
    $region2: #{tpu_custom_call.1} parent=1 // pred_check
      _
    $region3: #{tpu_custom_call.1} parent=1 // pred_check_branch
      %11 = sbr.rel (0) target = $region5
    $region4: #{tpu_custom_call.1} parent=1 // pred_region
      %s13 = ssub.s32 256, 256
      %14 = vsyncadd [#allocation3], %s13
      %s15 = sshll.u32 [#allocation2], 4
      %s16 = int_to_ptr.vmem [resolvable:$true] %s15
      %21 = dma.hbm_to_vmem [thread:$0]  %s0, 256, %s16, [#allocation3], 128, 128, 8
    $region5: #{tpu_custom_call.1} parent=1 // pred_fallthru
      _
    // Predicated region
    $region6: #{tpu_custom_call.1} parent=1 // pred_check
      _
    $region7: #{tpu_custom_call.1} parent=1 // pred_check_branch
      %23 = sbr.rel (0) target = $region9
    $region8: #{tpu_custom_call.1} parent=1 // pred_region
      _
    $region9: #{tpu_custom_call.1} parent=1 // pred_fallthru
      _
    // Predicated region
    $region10: #{tpu_custom_call.1} parent=1 // pred_check
      _
    $region11: #{tpu_custom_call.1} parent=1 // pred_check_branch
      %25 = sbr.rel (0) target = $region13
    $region12: #{tpu_custom_call.1} parent=1 // pred_region
      _
    $region13: #{tpu_custom_call.1} parent=1 // pred_fallthru
      _
    // Predicated region
    $region14: #{tpu_custom_call.1} parent=1 // pred_check
      _
    $region15: #{tpu_custom_call.1} parent=1 // pred_check_branch
      %27 = sbr.rel (0) target = $region17
    $region16: #{tpu_custom_call.1} parent=1 // pred_region
      %28 = dma.done [#allocation3], 256
    $region17: #{tpu_custom_call.1} parent=1 // pred_fallthru
      _
    %v29 = vld [vmem:[#allocation2] sm:$0xff]
    %v30 = vld [vmem:[#allocation2 + $0x8] sm:$0xff]
    %vm31 = vcmask 261120
    %v32 = vsel %vm31, %v29, 0.0
    %33 = vadd.xlane.f32.xlu0 %v32
    %v34 = vpop.xlane.xlu0 %33
    %v35 = vsel %vm31, %v30, 0.0
    %36 = vadd.xlane.f32.xlu0 %v35
    %v37 = vpop.xlane.xlu0 %36
    %v38 = vrcp.pop 32.0
    %v39 = vmul.f32 %v34, %v38
    %v40 = vmul.f32 %v37, %v38
    %v41 = vsub.f32 %v29, %v39
    %v42 = vsub.f32 %v30, %v40
    %v43 = vmul.f32 %v41, %v41
    %v44 = vmul.f32 %v42, %v42
    %v45 = vsel %vm31, %v43, 0.0
    %46 = vadd.xlane.f32.xlu0 %v45
    %v47 = vpop.xlane.xlu0 %46
    %v48 = vsel %vm31, %v44, 0.0
    %49 = vadd.xlane.f32.xlu0 %v48
    %v50 = vpop.xlane.xlu0 %49
    %v51 = vmul.f32 %v47, %v38
    %v52 = vmul.f32 %v50, %v38
    %v53 = vadd.f32 %v51, 1e-12
    %v54 = vadd.f32 %v52, 1e-12
    %v55 = vrsqrt.pop %v53
    %v56 = vrsqrt.pop %v54
    %v57 = vmul.f32 %v41, %v55
    %v58 = vmul.f32 %v42, %v56
    %v59 = vld [vmem:[%s1] sm:$0x1]
    %v61 = vlaneseq
    %v62 = vshrl.u32 %v61, 7
    %v63 = vsub.s32 0, %v62
    %v64 = vrot.slane %v59, %v63
    %v66 = vmul.f32 %v57, %v64
    %v67 = vmul.f32 %v58, %v64
    %v68 = vld [vmem:[%s2] sm:$0x1]
    %v70 = vlaneseq
    %v71 = vshrl.u32 %v70, 7
    %v72 = vsub.s32 0, %v71
    %v73 = vrot.slane %v68, %v72
    %v75 = vadd.f32 %v66, %v73
    %v76 = vadd.f32 %v67, %v73
    %v77 = vpack.c.bf16 %v76, %v75
    %v79 = vunpack.c.l.b16 %v77
    %v80 = vunpack.c.h.b16 %v77
    %v81 = vpack.c.b16 %v79, %v79
    %v82 = vpack.c.b16 %v80, %v80
    %vm85 = vcmask 257024
    %86 = vst.msk [vmem:[#allocation5] sm:$0xf] %vm85, %v81
    %87 = vst.msk [vmem:[#allocation5 + $0x4] sm:$0xf] %vm85, %v82
    // Predicated region
    $region18: #{tpu_custom_call.1} parent=1 // pred_check
      _
    $region19: #{tpu_custom_call.1} parent=1 // pred_check_branch
      %89 = sbr.rel (0) target = $region21
    $region20: #{tpu_custom_call.1} parent=1 // pred_region
      %s91 = ssub.s32 128, 128
      %92 = vsyncadd [#allocation4], %s91
      %s93 = sshll.u32 [#allocation5], 4
      %s94 = int_to_ptr.vmem [resolvable:$true] %s93
      %99 = dma.vmem_to_hbm [thread:$0]  %s94, 128, %s3, [#allocation4], 64, 64, 4
    $region21: #{tpu_custom_call.1} parent=1 // pred_fallthru
      _
    // Predicated region
    $region22: #{tpu_custom_call.1} parent=1 // pred_check
      _
    $region23: #{tpu_custom_call.1} parent=1 // pred_check_branch
      %101 = sbr.rel (0) target = $region25
    $region24: #{tpu_custom_call.1} parent=1 // pred_region
      %102 = dma.done [#allocation4], 128
    $region25: #{tpu_custom_call.1} parent=1 // pred_fallthru
      _
    %103 = vsyncpa [#allocation3], 1
    %104 = vsyncpa [#allocation4], 1

</llo_original>
